<compile_context>
chip_gen: v7x
topology: tpu7x:2x2x1
jax: 0.10.0
libtpu: 0.0.40
codegen_flags: <defaults>
</compile_context>

<pallas_src>
import functools
import math

import jax
import jax.numpy as jnp
from jax import lax
from jax.experimental import pallas as pl
from jax.experimental.pallas import tpu as pltpu


def _round_up(x, m):
    return (x + m - 1) // m * m


# ------------------------------ Pallas kernel -------------------------------


def _fused_block_kernel(offs, wo, wp, slope, gain,
                        x_ref, w0_ref, b0_ref, w1_ref, b1_ref, y_ref,
                        slab0, y0_buf, slab1):
    """Fused ConvBlockDown for one batch element.

    x_ref  : (1, 4*Cin, (Ho+3)*wp)  bf16  phase-merged, zero-padded input
    w0_ref : (Cout, 36*Cin)         bf16  conv0 taps stacked along K
    b0_ref : (Cout, 1)              f32
    w1_ref : (Cout, 9*Cout)         bf16  conv1 taps stacked along K
    b1_ref : (Cout, 1)              f32
    y_ref  : (1, Cout, Ho*wp)       f32   lane-dense output (Ho*wp % 128 == 0)
    slab0  : VMEM (36*Cin, Ho*wp)   bf16  K-stacked conv0 operand
    y0_buf : VMEM (Cout, (Ho+3)*wp) f32   conv0 output, conv1 pad baked in
    slab1  : VMEM (9*Cout, Ho*wp)   bf16  K-stacked conv1 operand
    """
    c0 = x_ref.shape[1]                  # 4 * Cin (phase merged into channels)
    cout = y_ref.shape[1]
    n = y_ref.shape[2]                   # Ho * wp

    # ---- conv0: stack the 9 (sh, tw) taps along K, single MXU matmul -------
    for t, off in enumerate(offs):
        slab0[t * c0:(t + 1) * c0, :] = x_ref[0, :, off:off + n]
    y0 = jnp.dot(w0_ref[...], slab0[...], preferred_element_type=jnp.float32)
    y0 = y0 + b0_ref[...]
    y0 = jnp.where(y0 >= 0.0, y0, slope * y0) * gain          # bias_act

    # Zero the lane-padding columns (col >= Wo): they become conv1's zero pad.
    col = lax.broadcasted_iota(jnp.int32, (1, n), 1) % wp
    y0 = jnp.where(col < wo, y0, 0.0)

    # Place y0 into the conv1 input buffer with a 1-pixel top/left pad baked
    # into the flat layout (row r+1, lane offset 1).
    y0_buf[...] = jnp.zeros_like(y0_buf)
    y0_buf[:, wp + 1:wp + 1 + n] = y0

    # ---- conv1: same 9-tap K stacking with K = 9*Cout -----------------------
    for t, off in enumerate(offs):
        slab1[t * cout:(t + 1) * cout, :] = (
            y0_buf[:, off:off + n].astype(slab1.dtype))
    y1 = jnp.dot(w1_ref[...], slab1[...], preferred_element_type=jnp.float32)
    y1 = y1 + b1_ref[...]
    y1 = jnp.where(y1 >= 0.0, y1, slope * y1) * gain
    y_ref[0] = y1.astype(y_ref.dtype)


# --------------------------------- module -----------------------------------


_ACTIVATIONS = {            # bias_act: (leaky slope, def_gain)
    'linear': (1.0, 1.0),
    'relu': (0.0, math.sqrt(2.0)),
    'lrelu': (0.2, math.sqrt(2.0)),
}


class ConvBlockDown:
    """Pallas/TPU port of ConvBlockDown (two Conv2dLayers, first with down=2)."""

    def __init__(self, in_channels, out_channels, activation='lrelu', key=None):
        if key is None:
            key = jax.random.PRNGKey(0)
        kw0, kw1, kb0, kb1 = jax.random.split(key, 4)
        self.in_channels = in_channels
        self.out_channels = out_channels
        self.act_slope, self.act_gain = _ACTIVATIONS[activation]

        # torch.randn init for weights; torch bias init is zeros -- small random
        # values are used here so the bias path is actually exercised.
        self.w0 = jax.random.normal(kw0, (out_channels, in_channels, 3, 3),
                                    jnp.float32)
        self.b0 = 0.1 * jax.random.normal(kb0, (out_channels,), jnp.float32)
        self.w1 = jax.random.normal(kw1, (out_channels, out_channels, 3, 3),
                                    jnp.float32)
        self.b1 = 0.1 * jax.random.normal(kb1, (out_channels,), jnp.float32)

        g0 = 1.0 / math.sqrt(in_channels * 9)
        g1 = 1.0 / math.sqrt(out_channels * 9)

        # setup_filter([1,3,3,1]): normalized separable low-pass (sum == 1).
        f1 = jnp.array([1.0, 3.0, 3.0, 1.0], jnp.float32)
        f2 = jnp.outer(f1, f1)
        self.f2 = f2 / jnp.sum(f2)

        # conv0 (down=2 fast path) = upfirdn2d(x, f, pad=2) then 3x3 stride-2
        # conv.  Fold the depthwise low-pass into an effective 6x6 stride-2
        # kernel: weff = (w0 * gain) fully correlated with f.
        w0g = self.w0 * g0
        weff = jnp.zeros((out_channels, in_channels, 6, 6), jnp.float32)
        for u in range(3):
            for v in range(3):
                weff = weff.at[:, :, u:u + 4, v:v + 4].add(
                    w0g[:, :, u:u + 1, v:v + 1] * self.f2[None, None])

        # 2x2 phase decomposition removes the stride; merge the phase axis into
        # the channel axis and stack the 9 remaining spatial taps along K:
        #   K index = ((sh*3 + tw)*4 + e*2 + f) * Cin + i
        weff_r = weff.reshape(out_channels, in_channels, 3, 2, 3, 2)  # o,i,sh,e,tw,f
        self.w0_stack = jnp.transpose(weff_r, (0, 2, 4, 3, 5, 1)).reshape(
            out_channels, 36 * in_channels).astype(jnp.bfloat16)
        # conv1 taps stacked along K: K index = (sh*3 + tw) * Cout + j
        self.w1_stack = jnp.transpose(self.w1 * g1, (0, 2, 3, 1)).reshape(
            out_channels, 9 * out_channels).astype(jnp.bfloat16)
        self.b0c = self.b0.reshape(out_channels, 1)
        self.b1c = self.b1.reshape(out_channels, 1)

    def __call__(self, x):
        B, Cin, H, W = x.shape
        assert Cin == self.in_channels
        assert H % 2 == 0 and W % 2 == 0
        Cout = self.out_channels
        Ho, Wo = H // 2, W // 2

        # Smallest lane pitch that still gives lane-dense (128-multiple) stores.
        wp = _round_up(Wo + 2, 8)
        while (Ho * wp) % 128 != 0:
            wp += 8
        n = Ho * wp

        # Pad 2 (folded 6x6 receptive field), 2x2 phase split merged into the
        # channel axis, pad width to wp plus one extra zero row (tap overreach
        # on the discarded lane-padding columns stays in bounds).
        xp = jnp.pad(x, ((0, 0), (0, 0), (2, 2), (2, 2)))
        xph = jnp.stack([xp[:, :, e::2, f::2] for e in (0, 1) for f in (0, 1)],
                        axis=1).reshape(B, 4 * Cin, Ho + 2, Wo + 2)
        xph = jnp.pad(xph, ((0, 0), (0, 0), (0, 1), (0, wp - (Wo + 2))))
        xflat = xph.reshape(B, 4 * Cin, (Ho + 3) * wp).astype(jnp.bfloat16)

        offs = tuple(sh * wp + tw for sh in range(3) for tw in range(3))
        kernel = functools.partial(_fused_block_kernel, offs, Wo, wp,
                                   float(self.act_slope), float(self.act_gain))

        y = pl.pallas_call(
            kernel,
            out_shape=jax.ShapeDtypeStruct((B, Cout, n), jnp.float32),
            grid=(B,),
            in_specs=[
                # per-batch phase-merged input block
                pl.BlockSpec((1, 4 * Cin, (Ho + 3) * wp), lambda b: (b, 0, 0)),
                # stacked weights / biases: constant index maps -> VMEM resident
                pl.BlockSpec((Cout, 36 * Cin), lambda b: (0, 0)),
                pl.BlockSpec((Cout, 1), lambda b: (0, 0)),
                pl.BlockSpec((Cout, 9 * Cout), lambda b: (0, 0)),
                pl.BlockSpec((Cout, 1), lambda b: (0, 0)),
            ],
            out_specs=pl.BlockSpec((1, Cout, n), lambda b: (b, 0, 0)),
            scratch_shapes=[
                pltpu.VMEM((36 * Cin, n), jnp.bfloat16),
                pltpu.VMEM((Cout, (Ho + 3) * wp), jnp.float32),
                pltpu.VMEM((9 * Cout, n), jnp.bfloat16),
            ],
            compiler_params=pltpu.CompilerParams(
                dimension_semantics=("parallel",),
                vmem_limit_bytes=32 * 1024 * 1024),
        )(xflat, self.w0_stack, self.b0c, self.w1_stack, self.b1c)

        # Drop the lane-padding columns (store itself was lane dense).
        return y.reshape(B, Cout, Ho, wp)[:, :, :, :Wo]


# ----------------------------- pure-JAX reference ---------------------------


def _reference(x, layer: ConvBlockDown):
    g0 = 1.0 / math.sqrt(layer.in_channels * 9)
    g1 = 1.0 / math.sqrt(layer.out_channels * 9)
    slope, gain = layer.act_slope, layer.act_gain
    dn = ('NCHW', 'OIHW', 'NCHW')

    def act(v):
        return jnp.where(v >= 0.0, v, slope * v) * gain

    # conv0: depthwise low-pass (pad 2), then 3x3 stride-2 conv, then bias_act.
    cin = x.shape[1]
    filt = jnp.tile(layer.f2[None, None], (cin, 1, 1, 1))
    xf = lax.conv_general_dilated(x, filt, (1, 1), [(2, 2), (2, 2)],
                                  feature_group_count=cin,
                                  dimension_numbers=dn)
    y0 = lax.conv_general_dilated(xf, layer.w0 * g0, (2, 2), [(0, 0), (0, 0)],
                                  dimension_numbers=dn)
    y0 = act(y0 + layer.b0.reshape(1, -1, 1, 1))
    # conv1: 3x3 stride-1 pad-1 conv, then bias_act.
    y1 = lax.conv_general_dilated(y0, layer.w1 * g1, (1, 1), [(1, 1), (1, 1)],
                                  dimension_numbers=dn)
    y1 = act(y1 + layer.b1.reshape(1, -1, 1, 1))
    return y1


if __name__ == "__main__":
    key = jax.random.PRNGKey(0)
    k_mod, k_x = jax.random.split(key)

    B, Cin, Cout, H, W = 2, 4, 8, 16, 16
    block = ConvBlockDown(Cin, Cout, activation='lrelu', key=k_mod)

    x = jax.random.normal(k_x, (B, Cin, H, W), dtype=jnp.float32)

    y = block(x)
    jax.block_until_ready(y)
    assert y.shape == (B, Cout, H // 2, W // 2), y.shape

    y_ref = _reference(x, block)
    max_err = float(jnp.max(jnp.abs(y - y_ref)))
    # bf16 matmul operands with f32 accumulation -> relaxed tolerance.
    assert jnp.allclose(y, y_ref, atol=3e-2, rtol=3e-2), max_err

    print("KERNEL_OK")
</pallas_src>

<mosaic_0001>
module attributes {stable_mosaic.version = 11 : i64} {
  func.func @_fused_block_kernel(%arg0: i32, %arg1: memref<1x16x176xbf16, #tpu.memory_space<vmem>>, %arg2: memref<8x144xbf16, #tpu.memory_space<vmem>>, %arg3: memref<8x1xf32, #tpu.memory_space<vmem>>, %arg4: memref<8x72xbf16, #tpu.memory_space<vmem>>, %arg5: memref<8x1xf32, #tpu.memory_space<vmem>>, %arg6: memref<1x8x128xf32, #tpu.memory_space<vmem>>, %arg7: memref<144x128xbf16, #tpu.memory_space<vmem>>, %arg8: memref<8x176xf32, #tpu.memory_space<vmem>>, %arg9: memref<72x128xbf16, #tpu.memory_space<vmem>>) attributes {dimension_semantics = [#tpu.dimension_semantics<parallel>], iteration_bounds = array<i64: 2>, scalar_prefetch = 0 : i64, scratch_operands = 3 : i64, tpu.core_type = #tpu.core_type<tc>, window_params = [{transform_indices = @transform_0, window_bounds = array<i64: 1, 16, 176>}, {pipeline_mode = #tpu.pipeline_mode<synchronous>, transform_indices = @transform_1, window_bounds = array<i64: 8, 144>}, {pipeline_mode = #tpu.pipeline_mode<synchronous>, transform_indices = @transform_2, window_bounds = array<i64: 8, 1>}, {pipeline_mode = #tpu.pipeline_mode<synchronous>, transform_indices = @transform_3, window_bounds = array<i64: 8, 72>}, {pipeline_mode = #tpu.pipeline_mode<synchronous>, transform_indices = @transform_4, window_bounds = array<i64: 8, 1>}, {transform_indices = @transform_5, window_bounds = array<i64: 1, 8, 128>}]} {
    %c0 = arith.constant 0 : index
    %c0_0 = arith.constant 0 : index
    %c0_1 = arith.constant 0 : index
    %0 = vector.load %arg1[%c0, %c0_0, %c0_1] : memref<1x16x176xbf16, #tpu.memory_space<vmem>>, vector<1x16x128xbf16>
    %1 = vector.shape_cast %0 : vector<1x16x128xbf16> to vector<16x128xbf16>
    %c0_2 = arith.constant 0 : index
    %c0_3 = arith.constant 0 : index
    %2 = vector.load %arg7[%c0_2, %c0_3] : memref<144x128xbf16, #tpu.memory_space<vmem>>, vector<16x128xbf16>
    tpu.vector_store %arg7[%c0_2, %c0_3], %1 {strides = array<i32>} : memref<144x128xbf16, #tpu.memory_space<vmem>>, vector<16x128xbf16>,
    %c0_4 = arith.constant 0 : index
    %c0_5 = arith.constant 0 : index
    %c1 = arith.constant 1 : index
    %3 = vector.load %arg1[%c0_4, %c0_5, %c1] : memref<1x16x176xbf16, #tpu.memory_space<vmem>>, vector<1x16x128xbf16>
    %4 = vector.shape_cast %3 : vector<1x16x128xbf16> to vector<16x128xbf16>
    %c16 = arith.constant 16 : index
    %c0_6 = arith.constant 0 : index
    %5 = vector.load %arg7[%c16, %c0_6] : memref<144x128xbf16, #tpu.memory_space<vmem>>, vector<16x128xbf16>
    tpu.vector_store %arg7[%c16, %c0_6], %4 {strides = array<i32>} : memref<144x128xbf16, #tpu.memory_space<vmem>>, vector<16x128xbf16>,
    %c0_7 = arith.constant 0 : index
    %c0_8 = arith.constant 0 : index
    %c2 = arith.constant 2 : index
    %6 = vector.load %arg1[%c0_7, %c0_8, %c2] : memref<1x16x176xbf16, #tpu.memory_space<vmem>>, vector<1x16x128xbf16>
    %7 = vector.shape_cast %6 : vector<1x16x128xbf16> to vector<16x128xbf16>
    %c32 = arith.constant 32 : index
    %c0_9 = arith.constant 0 : index
    %8 = vector.load %arg7[%c32, %c0_9] : memref<144x128xbf16, #tpu.memory_space<vmem>>, vector<16x128xbf16>
    tpu.vector_store %arg7[%c32, %c0_9], %7 {strides = array<i32>} : memref<144x128xbf16, #tpu.memory_space<vmem>>, vector<16x128xbf16>,
    %c0_10 = arith.constant 0 : index
    %c0_11 = arith.constant 0 : index
    %c16_12 = arith.constant 16 : index
    %9 = vector.load %arg1[%c0_10, %c0_11, %c16_12] : memref<1x16x176xbf16, #tpu.memory_space<vmem>>, vector<1x16x128xbf16>
    %10 = vector.shape_cast %9 : vector<1x16x128xbf16> to vector<16x128xbf16>
    %c48 = arith.constant 48 : index
    %c0_13 = arith.constant 0 : index
    %11 = vector.load %arg7[%c48, %c0_13] : memref<144x128xbf16, #tpu.memory_space<vmem>>, vector<16x128xbf16>
    tpu.vector_store %arg7[%c48, %c0_13], %10 {strides = array<i32>} : memref<144x128xbf16, #tpu.memory_space<vmem>>, vector<16x128xbf16>,
    %c0_14 = arith.constant 0 : index
    %c0_15 = arith.constant 0 : index
    %c17 = arith.constant 17 : index
    %12 = vector.load %arg1[%c0_14, %c0_15, %c17] : memref<1x16x176xbf16, #tpu.memory_space<vmem>>, vector<1x16x128xbf16>
    %13 = vector.shape_cast %12 : vector<1x16x128xbf16> to vector<16x128xbf16>
    %c64 = arith.constant 64 : index
    %c0_16 = arith.constant 0 : index
    %14 = vector.load %arg7[%c64, %c0_16] : memref<144x128xbf16, #tpu.memory_space<vmem>>, vector<16x128xbf16>
    tpu.vector_store %arg7[%c64, %c0_16], %13 {strides = array<i32>} : memref<144x128xbf16, #tpu.memory_space<vmem>>, vector<16x128xbf16>,
    %c0_17 = arith.constant 0 : index
    %c0_18 = arith.constant 0 : index
    %c18 = arith.constant 18 : index
    %15 = vector.load %arg1[%c0_17, %c0_18, %c18] : memref<1x16x176xbf16, #tpu.memory_space<vmem>>, vector<1x16x128xbf16>
    %16 = vector.shape_cast %15 : vector<1x16x128xbf16> to vector<16x128xbf16>
    %c80 = arith.constant 80 : index
    %c0_19 = arith.constant 0 : index
    %17 = vector.load %arg7[%c80, %c0_19] : memref<144x128xbf16, #tpu.memory_space<vmem>>, vector<16x128xbf16>
    tpu.vector_store %arg7[%c80, %c0_19], %16 {strides = array<i32>} : memref<144x128xbf16, #tpu.memory_space<vmem>>, vector<16x128xbf16>,
    %c0_20 = arith.constant 0 : index
    %c0_21 = arith.constant 0 : index
    %c32_22 = arith.constant 32 : index
    %18 = vector.load %arg1[%c0_20, %c0_21, %c32_22] : memref<1x16x176xbf16, #tpu.memory_space<vmem>>, vector<1x16x128xbf16>
    %19 = vector.shape_cast %18 : vector<1x16x128xbf16> to vector<16x128xbf16>
    %c96 = arith.constant 96 : index
    %c0_23 = arith.constant 0 : index
    %20 = vector.load %arg7[%c96, %c0_23] : memref<144x128xbf16, #tpu.memory_space<vmem>>, vector<16x128xbf16>
    tpu.vector_store %arg7[%c96, %c0_23], %19 {strides = array<i32>} : memref<144x128xbf16, #tpu.memory_space<vmem>>, vector<16x128xbf16>,
    %c0_24 = arith.constant 0 : index
    %c0_25 = arith.constant 0 : index
    %c33 = arith.constant 33 : index
    %21 = vector.load %arg1[%c0_24, %c0_25, %c33] : memref<1x16x176xbf16, #tpu.memory_space<vmem>>, vector<1x16x128xbf16>
    %22 = vector.shape_cast %21 : vector<1x16x128xbf16> to vector<16x128xbf16>
    %c112 = arith.constant 112 : index
    %c0_26 = arith.constant 0 : index
    %23 = vector.load %arg7[%c112, %c0_26] : memref<144x128xbf16, #tpu.memory_space<vmem>>, vector<16x128xbf16>
    tpu.vector_store %arg7[%c112, %c0_26], %22 {strides = array<i32>} : memref<144x128xbf16, #tpu.memory_space<vmem>>, vector<16x128xbf16>,
    %c0_27 = arith.constant 0 : index
    %c0_28 = arith.constant 0 : index
    %c34 = arith.constant 34 : index
    %24 = vector.load %arg1[%c0_27, %c0_28, %c34] : memref<1x16x176xbf16, #tpu.memory_space<vmem>>, vector<1x16x128xbf16>
    %25 = vector.shape_cast %24 : vector<1x16x128xbf16> to vector<16x128xbf16>
    %c128 = arith.constant 128 : index
    %c0_29 = arith.constant 0 : index
    %26 = vector.load %arg7[%c128, %c0_29] : memref<144x128xbf16, #tpu.memory_space<vmem>>, vector<16x128xbf16>
    tpu.vector_store %arg7[%c128, %c0_29], %25 {strides = array<i32>} : memref<144x128xbf16, #tpu.memory_space<vmem>>, vector<16x128xbf16>,
    %c0_30 = arith.constant 0 : index
    %c0_31 = arith.constant 0 : index
    %27 = vector.load %arg2[%c0_30, %c0_31] : memref<8x144xbf16, #tpu.memory_space<vmem>>, vector<8x144xbf16>
    %c0_32 = arith.constant 0 : index
    %c0_33 = arith.constant 0 : index
    %28 = vector.load %arg7[%c0_32, %c0_33] : memref<144x128xbf16, #tpu.memory_space<vmem>>, vector<144x128xbf16>
    %cst = arith.constant dense<0.000000e+00> : vector<8x128xf32>
    %29 = tpu.matmul %27, %28, %cst {dimension_numbers = #tpu.dot_dimension_numbers<[1], [0], [0], [1], [0, 0, 1, 1], [], []>} : vector<8x144xbf16>, vector<144x128xbf16>, vector<8x128xf32> -> vector<8x128xf32>
    %c0_34 = arith.constant 0 : index
    %c0_35 = arith.constant 0 : index
    %30 = vector.load %arg3[%c0_34, %c0_35] : memref<8x1xf32, #tpu.memory_space<vmem>>, vector<8x1xf32>
    %31 = vector.broadcast %30 : vector<8x1xf32> to vector<8x128xf32>
    %32 = arith.addf %29, %31 : vector<8x128xf32>
    %cst_36 = arith.constant 0.000000e+00 : f32
    %33 = vector.broadcast %cst_36 : f32 to vector<8x128xf32>
    %34 = arith.cmpf oge, %32, %33 : vector<8x128xf32>
    %cst_37 = arith.constant 2.000000e-01 : f32
    %35 = vector.broadcast %cst_37 : f32 to vector<8x128xf32>
    %36 = arith.mulf %35, %32 : vector<8x128xf32>
    %37 = arith.select %34, %32, %36 : vector<8x128xi1>, vector<8x128xf32>
    %cst_38 = arith.constant 1.41421354 : f32
    %38 = vector.broadcast %cst_38 : f32 to vector<8x128xf32>
    %39 = arith.mulf %37, %38 : vector<8x128xf32>
    %40 = tpu.iota {dimensions = array<i32: 1>} : vector<1x128xi32>
    %c16_i32 = arith.constant 16 : i32
    %c0_i32 = arith.constant 0 : i32
    %41 = arith.cmpi eq, %c16_i32, %c0_i32 : i32
    %c1_i32 = arith.constant 1 : i32
    %42 = arith.select %41, %c1_i32, %c16_i32 : i32
    %43 = vector.broadcast %42 : i32 to vector<1x128xi32>
    %44 = arith.remsi %40, %43 : vector<1x128xi32>
    %c0_i32_39 = arith.constant 0 : i32
    %45 = vector.broadcast %c0_i32_39 : i32 to vector<1x128xi32>
    %46 = arith.cmpi ne, %44, %45 : vector<1x128xi32>
    %c0_i32_40 = arith.constant 0 : i32
    %47 = vector.broadcast %c0_i32_40 : i32 to vector<1x128xi32>
    %48 = arith.cmpi slt, %44, %47 : vector<1x128xi32>
    %c0_i32_41 = arith.constant 0 : i32
    %49 = arith.cmpi slt, %42, %c0_i32_41 : i32
    %50 = vector.broadcast %49 : i1 to vector<1x128xi1>
    %51 = vector.broadcast %50 : vector<1x128xi1> to vector<1x128xi1>
    %52 = arith.xori %48, %51 : vector<1x128xi1>
    %53 = arith.andi %52, %46 : vector<1x128xi1>
    %54 = vector.broadcast %42 : i32 to vector<1x128xi32>
    %55 = arith.addi %44, %54 : vector<1x128xi32>
    %56 = arith.select %53, %55, %44 : vector<1x128xi1>, vector<1x128xi32>
    %c8_i32 = arith.constant 8 : i32
    %57 = vector.broadcast %c8_i32 : i32 to vector<1x128xi32>
    %58 = arith.cmpi slt, %56, %57 : vector<1x128xi32>
    %cst_42 = arith.constant 0.000000e+00 : f32
    %59 = vector.shape_cast %58 : vector<1x128xi1> to vector<1x128xi1>
    %60 = vector.broadcast %59 : vector<1x128xi1> to vector<8x128xi1>
    %61 = vector.broadcast %cst_42 : f32 to vector<8x128xf32>
    %62 = arith.select %60, %39, %61 : vector<8x128xi1>, vector<8x128xf32>
    %cst_43 = arith.constant 0.000000e+00 : f32
    %63 = vector.broadcast %cst_43 : f32 to vector<8x176xf32>
    %c0_44 = arith.constant 0 : index
    %c0_45 = arith.constant 0 : index
    %64 = vector.load %arg8[%c0_44, %c0_45] : memref<8x176xf32, #tpu.memory_space<vmem>>, vector<8x176xf32>
    tpu.vector_store %arg8[%c0_44, %c0_45], %63 {strides = array<i32>} : memref<8x176xf32, #tpu.memory_space<vmem>>, vector<8x176xf32>,
    %c0_46 = arith.constant 0 : index
    %c17_47 = arith.constant 17 : index
    %65 = vector.load %arg8[%c0_46, %c17_47] : memref<8x176xf32, #tpu.memory_space<vmem>>, vector<8x128xf32>
    tpu.vector_store %arg8[%c0_46, %c17_47], %62 {strides = array<i32>} : memref<8x176xf32, #tpu.memory_space<vmem>>, vector<8x128xf32>,
    %c0_48 = arith.constant 0 : index
    %c0_49 = arith.constant 0 : index
    %66 = vector.load %arg8[%c0_48, %c0_49] : memref<8x176xf32, #tpu.memory_space<vmem>>, vector<8x128xf32>
    %67 = arith.truncf %66 : vector<8x128xf32> to vector<8x128xbf16>
    %c0_50 = arith.constant 0 : index
    %c0_51 = arith.constant 0 : index
    %68 = vector.load %arg9[%c0_50, %c0_51] : memref<72x128xbf16, #tpu.memory_space<vmem>>, vector<8x128xbf16>
    tpu.vector_store %arg9[%c0_50, %c0_51], %67 {strides = array<i32>} : memref<72x128xbf16, #tpu.memory_space<vmem>>, vector<8x128xbf16>,
    %c0_52 = arith.constant 0 : index
    %c1_53 = arith.constant 1 : index
    %69 = vector.load %arg8[%c0_52, %c1_53] : memref<8x176xf32, #tpu.memory_space<vmem>>, vector<8x128xf32>
    %70 = arith.truncf %69 : vector<8x128xf32> to vector<8x128xbf16>
    %c8 = arith.constant 8 : index
    %c0_54 = arith.constant 0 : index
    %71 = vector.load %arg9[%c8, %c0_54] : memref<72x128xbf16, #tpu.memory_space<vmem>>, vector<8x128xbf16>
    tpu.vector_store %arg9[%c8, %c0_54], %70 {strides = array<i32>} : memref<72x128xbf16, #tpu.memory_space<vmem>>, vector<8x128xbf16>,
    %c0_55 = arith.constant 0 : index
    %c2_56 = arith.constant 2 : index
    %72 = vector.load %arg8[%c0_55, %c2_56] : memref<8x176xf32, #tpu.memory_space<vmem>>, vector<8x128xf32>
    %73 = arith.truncf %72 : vector<8x128xf32> to vector<8x128xbf16>
    %c16_57 = arith.constant 16 : index
    %c0_58 = arith.constant 0 : index
    %74 = vector.load %arg9[%c16_57, %c0_58] : memref<72x128xbf16, #tpu.memory_space<vmem>>, vector<8x128xbf16>
    tpu.vector_store %arg9[%c16_57, %c0_58], %73 {strides = array<i32>} : memref<72x128xbf16, #tpu.memory_space<vmem>>, vector<8x128xbf16>,
    %c0_59 = arith.constant 0 : index
    %c16_60 = arith.constant 16 : index
    %75 = vector.load %arg8[%c0_59, %c16_60] : memref<8x176xf32, #tpu.memory_space<vmem>>, vector<8x128xf32>
    %76 = arith.truncf %75 : vector<8x128xf32> to vector<8x128xbf16>
    %c24 = arith.constant 24 : index
    %c0_61 = arith.constant 0 : index
    %77 = vector.load %arg9[%c24, %c0_61] : memref<72x128xbf16, #tpu.memory_space<vmem>>, vector<8x128xbf16>
    tpu.vector_store %arg9[%c24, %c0_61], %76 {strides = array<i32>} : memref<72x128xbf16, #tpu.memory_space<vmem>>, vector<8x128xbf16>,
    %c0_62 = arith.constant 0 : index
    %c17_63 = arith.constant 17 : index
    %78 = vector.load %arg8[%c0_62, %c17_63] : memref<8x176xf32, #tpu.memory_space<vmem>>, vector<8x128xf32>
    %79 = arith.truncf %78 : vector<8x128xf32> to vector<8x128xbf16>
    %c32_64 = arith.constant 32 : index
    %c0_65 = arith.constant 0 : index
    %80 = vector.load %arg9[%c32_64, %c0_65] : memref<72x128xbf16, #tpu.memory_space<vmem>>, vector<8x128xbf16>
    tpu.vector_store %arg9[%c32_64, %c0_65], %79 {strides = array<i32>} : memref<72x128xbf16, #tpu.memory_space<vmem>>, vector<8x128xbf16>,
    %c0_66 = arith.constant 0 : index
    %c18_67 = arith.constant 18 : index
    %81 = vector.load %arg8[%c0_66, %c18_67] : memref<8x176xf32, #tpu.memory_space<vmem>>, vector<8x128xf32>
    %82 = arith.truncf %81 : vector<8x128xf32> to vector<8x128xbf16>
    %c40 = arith.constant 40 : index
    %c0_68 = arith.constant 0 : index
    %83 = vector.load %arg9[%c40, %c0_68] : memref<72x128xbf16, #tpu.memory_space<vmem>>, vector<8x128xbf16>
    tpu.vector_store %arg9[%c40, %c0_68], %82 {strides = array<i32>} : memref<72x128xbf16, #tpu.memory_space<vmem>>, vector<8x128xbf16>,
    %c0_69 = arith.constant 0 : index
    %c32_70 = arith.constant 32 : index
    %84 = vector.load %arg8[%c0_69, %c32_70] : memref<8x176xf32, #tpu.memory_space<vmem>>, vector<8x128xf32>
    %85 = arith.truncf %84 : vector<8x128xf32> to vector<8x128xbf16>
    %c48_71 = arith.constant 48 : index
    %c0_72 = arith.constant 0 : index
    %86 = vector.load %arg9[%c48_71, %c0_72] : memref<72x128xbf16, #tpu.memory_space<vmem>>, vector<8x128xbf16>
    tpu.vector_store %arg9[%c48_71, %c0_72], %85 {strides = array<i32>} : memref<72x128xbf16, #tpu.memory_space<vmem>>, vector<8x128xbf16>,
    %c0_73 = arith.constant 0 : index
    %c33_74 = arith.constant 33 : index
    %87 = vector.load %arg8[%c0_73, %c33_74] : memref<8x176xf32, #tpu.memory_space<vmem>>, vector<8x128xf32>
    %88 = arith.truncf %87 : vector<8x128xf32> to vector<8x128xbf16>
    %c56 = arith.constant 56 : index
    %c0_75 = arith.constant 0 : index
    %89 = vector.load %arg9[%c56, %c0_75] : memref<72x128xbf16, #tpu.memory_space<vmem>>, vector<8x128xbf16>
    tpu.vector_store %arg9[%c56, %c0_75], %88 {strides = array<i32>} : memref<72x128xbf16, #tpu.memory_space<vmem>>, vector<8x128xbf16>,
    %c0_76 = arith.constant 0 : index
    %c34_77 = arith.constant 34 : index
    %90 = vector.load %arg8[%c0_76, %c34_77] : memref<8x176xf32, #tpu.memory_space<vmem>>, vector<8x128xf32>
    %91 = arith.truncf %90 : vector<8x128xf32> to vector<8x128xbf16>
    %c64_78 = arith.constant 64 : index
    %c0_79 = arith.constant 0 : index
    %92 = vector.load %arg9[%c64_78, %c0_79] : memref<72x128xbf16, #tpu.memory_space<vmem>>, vector<8x128xbf16>
    tpu.vector_store %arg9[%c64_78, %c0_79], %91 {strides = array<i32>} : memref<72x128xbf16, #tpu.memory_space<vmem>>, vector<8x128xbf16>,
    %c0_80 = arith.constant 0 : index
    %c0_81 = arith.constant 0 : index
    %93 = vector.load %arg4[%c0_80, %c0_81] : memref<8x72xbf16, #tpu.memory_space<vmem>>, vector<8x72xbf16>
    %c0_82 = arith.constant 0 : index
    %c0_83 = arith.constant 0 : index
    %94 = vector.load %arg9[%c0_82, %c0_83] : memref<72x128xbf16, #tpu.memory_space<vmem>>, vector<72x128xbf16>
    %cst_84 = arith.constant dense<0.000000e+00> : vector<8x128xf32>
    %95 = tpu.matmul %93, %94, %cst_84 {dimension_numbers = #tpu.dot_dimension_numbers<[1], [0], [0], [1], [0, 0, 1, 1], [], []>} : vector<8x72xbf16>, vector<72x128xbf16>, vector<8x128xf32> -> vector<8x128xf32>
    %c0_85 = arith.constant 0 : index
    %c0_86 = arith.constant 0 : index
    %96 = vector.load %arg5[%c0_85, %c0_86] : memref<8x1xf32, #tpu.memory_space<vmem>>, vector<8x1xf32>
    %97 = vector.broadcast %96 : vector<8x1xf32> to vector<8x128xf32>
    %98 = arith.addf %95, %97 : vector<8x128xf32>
    %cst_87 = arith.constant 0.000000e+00 : f32
    %99 = vector.broadcast %cst_87 : f32 to vector<8x128xf32>
    %100 = arith.cmpf oge, %98, %99 : vector<8x128xf32>
    %cst_88 = arith.constant 2.000000e-01 : f32
    %101 = vector.broadcast %cst_88 : f32 to vector<8x128xf32>
    %102 = arith.mulf %101, %98 : vector<8x128xf32>
    %103 = arith.select %100, %98, %102 : vector<8x128xi1>, vector<8x128xf32>
    %cst_89 = arith.constant 1.41421354 : f32
    %104 = vector.broadcast %cst_89 : f32 to vector<8x128xf32>
    %105 = arith.mulf %103, %104 : vector<8x128xf32>
    %c0_90 = arith.constant 0 : index
    %c0_91 = arith.constant 0 : index
    %c0_92 = arith.constant 0 : index
    %106 = vector.load %arg6[%c0_90, %c0_91, %c0_92] : memref<1x8x128xf32, #tpu.memory_space<vmem>>, vector<1x8x128xf32>
    %107 = vector.shape_cast %106 : vector<1x8x128xf32> to vector<8x128xf32>
    %108 = vector.shape_cast %105 : vector<8x128xf32> to vector<1x8x128xf32>
    tpu.vector_store %arg6[%c0_90, %c0_91, %c0_92], %108 {strides = array<i32>} : memref<1x8x128xf32, #tpu.memory_space<vmem>>, vector<1x8x128xf32>,
    return
  }
  func.func @transform_0(%arg0: i32) -> (i32, i32, i32) {
    %c0_i32 = arith.constant 0 : i32
    %c0_i32_0 = arith.constant 0 : i32
    %c0_i32_1 = arith.constant 0 : i32
    return %arg0, %c0_i32, %c0_i32_0 : i32, i32, i32
  }
  func.func @transform_1(%arg0: i32) -> (i32, i32) {
    %c0_i32 = arith.constant 0 : i32
    %c0_i32_0 = arith.constant 0 : i32
    %c0_i32_1 = arith.constant 0 : i32
    return %c0_i32, %c0_i32_0 : i32, i32
  }
  func.func @transform_2(%arg0: i32) -> (i32, i32) {
    %c0_i32 = arith.constant 0 : i32
    %c0_i32_0 = arith.constant 0 : i32
    %c0_i32_1 = arith.constant 0 : i32
    return %c0_i32, %c0_i32_0 : i32, i32
  }
  func.func @transform_3(%arg0: i32) -> (i32, i32) {
    %c0_i32 = arith.constant 0 : i32
    %c0_i32_0 = arith.constant 0 : i32
    %c0_i32_1 = arith.constant 0 : i32
    return %c0_i32, %c0_i32_0 : i32, i32
  }
  func.func @transform_4(%arg0: i32) -> (i32, i32) {
    %c0_i32 = arith.constant 0 : i32
    %c0_i32_0 = arith.constant 0 : i32
    %c0_i32_1 = arith.constant 0 : i32
    return %c0_i32, %c0_i32_0 : i32, i32
  }
  func.func @transform_5(%arg0: i32) -> (i32, i32, i32) {
    %c0_i32 = arith.constant 0 : i32
    %c0_i32_0 = arith.constant 0 : i32
    %c0_i32_1 = arith.constant 0 : i32
    return %arg0, %c0_i32, %c0_i32_0 : i32, i32, i32
  }
}

</mosaic_0001>

<llo_original>
// kernel: tpu_custom_call.1
$region0: #{tpu_custom_call.1}
  #allocation0 [shape = 'u32[]', space=smem, size = 0x4, offset = 0x4, fixed_abs, tag = 'smem constant byte address 0x4 - core index']
  #allocation1 [shape = 'u32[144,128]{1,0:T(1,128)}', space=vmem, size = 0x12000, scoped, tag = 'internal scratch']
  #allocation2 [shape = 'bf16[144,128]{1,0:T(16,128)(2,1)}', space=vmem, size = 0x9000, scoped, tag = 'scratch operand']
  #allocation3 [shape = 'f32[8,176]{1,0:T(8,128)}', space=vmem, size = 0x2000, scoped, tag = 'scratch operand']
  #allocation4 [shape = 'bf16[72,128]{1,0:T(8,128)(2,1)}', space=vmem, size = 0x4800, scoped, tag = 'scratch operand']
  %s0 = inlined_call_operand.hbm [shape: bf16[2,16,176], index: 0, kind: input, shape index: {}]
  %s1 = inlined_call_operand.vmem [shape: bf16[8,144], index: 1, kind: input, shape index: {}]
  %s2 = inlined_call_operand.vmem [shape: f32[8,1], index: 2, kind: input, shape index: {}]
  %s3 = inlined_call_operand.vmem [shape: bf16[8,72], index: 3, kind: input, shape index: {}]
  %s4 = inlined_call_operand.vmem [shape: f32[8,1], index: 4, kind: input, shape index: {}]
  %s5 = inlined_call_operand.hbm [shape: f32[2,8,128], index: 5, kind: output, shape index: {}]
  %s6 = sld [smem:[#allocation0]]
  $region57: #{tpu_custom_call.1} parent=0
    _
  %s8 = ssub.s32 1, %s6
  %s9 = scalar_select 0, %s8, %s6
  $region1: #{tpu_custom_call.1} parent=0
    #allocation5 [shape = 'u8[16384]{0}', space=vmem, size = 0x4000, scoped, tag = 'input window, operand 0']
    #allocation6 [shape = 's32[2]{0}', space=sflag, size = 0x8, scoped, tag = 'scoped memory for tpu_custom_call.1']
    #allocation7 [shape = 's32[2]{0}', space=sflag, size = 0x8, scoped, tag = 'scoped memory for tpu_custom_call.1']
    #allocation8 [shape = 'u8[8192]{0}', space=vmem, size = 0x2000, scoped, tag = 'output window, operand 0']
    %10 = vsyncpa [#allocation6], 0
    %s11 = scalar_lea.sflag [#allocation6], 1
    %12 = vsyncpa %s11, 0
    %13 = vsyncpa [#allocation7], 0
    %s14 = scalar_lea.sflag [#allocation7], 1
    %15 = vsyncpa %s14, 0
    loop: start=0, step=1, limit=4
    $region2: #{tpu_custom_call.1} parent=1 // loop_pre_header
      _
    $region3: #{tpu_custom_call.1} parent=1 // loop_header
      %s17 = sphi 0, %s21
      %p18 = scmp.ge.s32.totalorder %s17, 4
      %s27 = sphi 0, %s29
      %s30 = sphi 0, %s27
      %s31 = sphi 0, %s30
      %s47 = sphi 0, %s31
      %s51 = sphi 0, %s51
      %s53 = sphi 0, %s51
      %s54 = sphi 0, %s53
      %s68 = sphi 0, %s54
      %s72 = sphi 0, %s72
      %s74 = sphi 0, %s72
      %s75 = sphi 0, %s74
      %s89 = sphi 0, %s75
      %s93 = sphi 0, %s93
      %s95 = sphi 0, %s93
      %s96 = sphi 0, %s95
      %s110 = sphi 0, %s96
      %s114 = sphi 0, %s114
      %s116 = sphi 0, %s114
      %s117 = sphi 0, %s116
      %s131 = sphi 0, %s117
      %s137 = sphi 0, %s139
      %s140 = sphi 0, %s137
      %s141 = sphi 0, %s140
      %s157 = sphi 0, %s141
    $region4: #{tpu_custom_call.1} parent=1 // loop_header_branch
      %20 = sbr.rel (%p18) target = $region8
    $region5: #{tpu_custom_call.1} parent=1 // loop_body
      %s22 = ssub.s32 %s17, 1
      %s23 = ssub.s32 %s17, 2
      %s24 = sadd.s32 %s17, 1
      %s25 = ssub.s32 %s17, %s24
      %p26 = scmp.eq.s32.totalorder %s25, 0
      %s28 = sadd.s32 %s27, 1
      %s29 = scalar_select %p26, %s27, %s28
      %p32 = pneg %p26
      %p33 = scmp.eq.s32.totalorder %s17, 1
      %p34 = por %p32, %p33
      %p35 = scmp.ne.s32.totalorder %s27, %s30
      %p36 = scmp.eq.s32.totalorder %s17, 0
      %p37 = por %p35, %p36
      %p38 = scmp.ne.s32.totalorder %s27, %s30
      %p39 = scmp.eq.s32.totalorder %s22, 1
      %p40 = por %p38, %p39
      %p41 = scmp.ne.s32.totalorder %s30, %s31
      %p42 = scmp.eq.s32.totalorder %s22, 0
      %p43 = por %p41, %p42
      %p44 = scmp.ne.s32.totalorder %s30, %s31
      %p45 = scmp.eq.s32.totalorder %s23, 1
      %p46 = por %p44, %p45
      %p48 = scmp.ne.s32.totalorder %s31, %s47
      %p49 = scmp.eq.s32.totalorder %s23, 0
      %p50 = por %p48, %p49
      %s52 = sadd.s32 %s51, 1
      %p55 = scmp.eq.s32.totalorder %s17, 1
      %p56 = scmp.ne.s32.totalorder %s51, %s53
      %p57 = scmp.eq.s32.totalorder %s17, 0
      %p58 = por %p56, %p57
      %p59 = scmp.ne.s32.totalorder %s51, %s53
      %p60 = scmp.eq.s32.totalorder %s22, 1
      %p61 = por %p59, %p60
      %p62 = scmp.ne.s32.totalorder %s53, %s54
      %p63 = scmp.eq.s32.totalorder %s22, 0
      %p64 = por %p62, %p63
      %p65 = scmp.ne.s32.totalorder %s53, %s54
      %p66 = scmp.eq.s32.totalorder %s23, 1
      %p67 = por %p65, %p66
      %p69 = scmp.ne.s32.totalorder %s54, %s68
      %p70 = scmp.eq.s32.totalorder %s23, 0
      %p71 = por %p69, %p70
      %s73 = sadd.s32 %s72, 1
      %p76 = scmp.eq.s32.totalorder %s17, 1
      %p77 = scmp.ne.s32.totalorder %s72, %s74
      %p78 = scmp.eq.s32.totalorder %s17, 0
      %p79 = por %p77, %p78
      %p80 = scmp.ne.s32.totalorder %s72, %s74
      %p81 = scmp.eq.s32.totalorder %s22, 1
      %p82 = por %p80, %p81
      %p83 = scmp.ne.s32.totalorder %s74, %s75
      %p84 = scmp.eq.s32.totalorder %s22, 0
      %p85 = por %p83, %p84
      %p86 = scmp.ne.s32.totalorder %s74, %s75
      %p87 = scmp.eq.s32.totalorder %s23, 1
      %p88 = por %p86, %p87
      %p90 = scmp.ne.s32.totalorder %s75, %s89
      %p91 = scmp.eq.s32.totalorder %s23, 0
      %p92 = por %p90, %p91
      %s94 = sadd.s32 %s93, 1
      %p97 = scmp.eq.s32.totalorder %s17, 1
      %p98 = scmp.ne.s32.totalorder %s93, %s95
      %p99 = scmp.eq.s32.totalorder %s17, 0
      %p100 = por %p98, %p99
      %p101 = scmp.ne.s32.totalorder %s93, %s95
      %p102 = scmp.eq.s32.totalorder %s22, 1
      %p103 = por %p101, %p102
      %p104 = scmp.ne.s32.totalorder %s95, %s96
      %p105 = scmp.eq.s32.totalorder %s22, 0
      %p106 = por %p104, %p105
      %p107 = scmp.ne.s32.totalorder %s95, %s96
      %p108 = scmp.eq.s32.totalorder %s23, 1
      %p109 = por %p107, %p108
      %p111 = scmp.ne.s32.totalorder %s96, %s110
      %p112 = scmp.eq.s32.totalorder %s23, 0
      %p113 = por %p111, %p112
      %s115 = sadd.s32 %s114, 1
      %p118 = scmp.eq.s32.totalorder %s17, 1
      %p119 = scmp.ne.s32.totalorder %s114, %s116
      %p120 = scmp.eq.s32.totalorder %s17, 0
      %p121 = por %p119, %p120
      %p122 = scmp.ne.s32.totalorder %s114, %s116
      %p123 = scmp.eq.s32.totalorder %s22, 1
      %p124 = por %p122, %p123
      %p125 = scmp.ne.s32.totalorder %s116, %s117
      %p126 = scmp.eq.s32.totalorder %s22, 0
      %p127 = por %p125, %p126
      %p128 = scmp.ne.s32.totalorder %s116, %s117
      %p129 = scmp.eq.s32.totalorder %s23, 1
      %p130 = por %p128, %p129
      %p132 = scmp.ne.s32.totalorder %s117, %s131
      %p133 = scmp.eq.s32.totalorder %s23, 0
      %p134 = por %p132, %p133
      %s135 = ssub.s32 %s17, %s24
      %p136 = scmp.eq.s32.totalorder %s135, 0
      %s138 = sadd.s32 %s137, 1
      %s139 = scalar_select %p136, %s137, %s138
      %p142 = pneg %p136
      %p143 = scmp.eq.s32.totalorder %s17, 1
      %p144 = por %p142, %p143
      %p145 = scmp.ne.s32.totalorder %s137, %s140
      %p146 = scmp.eq.s32.totalorder %s17, 0
      %p147 = por %p145, %p146
      %p148 = scmp.ne.s32.totalorder %s137, %s140
      %p149 = scmp.eq.s32.totalorder %s22, 1
      %p150 = por %p148, %p149
      %p151 = scmp.ne.s32.totalorder %s140, %s141
      %p152 = scmp.eq.s32.totalorder %s22, 0
      %p153 = por %p151, %p152
      %p154 = scmp.ne.s32.totalorder %s140, %s141
      %p155 = scmp.eq.s32.totalorder %s23, 1
      %p156 = por %p154, %p155
      %p158 = scmp.ne.s32.totalorder %s141, %s157
      %p159 = scmp.eq.s32.totalorder %s23, 0
      %p160 = por %p158, %p159
      %p161 = scmp.le.s32.totalorder 1, %s17
      %p162 = scmp.lt.s32.totalorder %s17, 3
      %p163 = pnand %p161, %p162
      %p164 = pneg %p163
      // Predicated region
      $region9: #{tpu_custom_call.1} parent=5 // pred_check
        _
      $region10: #{tpu_custom_call.1} parent=5 // pred_check_branch
        %166 = sbr.rel (%p163) target = $region12
      $region11: #{tpu_custom_call.1} parent=5 // pred_region
        %s167 = ssub.s32 %s17, 1
        // Predicated region
        $region13: #{tpu_custom_call.1} parent=11 // pred_check
          %p168 = pneg %p64
        $region14: #{tpu_custom_call.1} parent=11 // pred_check_branch
          %170 = sbr.rel (%p168) target = $region16
        $region15: #{tpu_custom_call.1} parent=11 // pred_region
          _
        $region16: #{tpu_custom_call.1} parent=11 // pred_fallthru
          _
        // Predicated region
        $region17: #{tpu_custom_call.1} parent=11 // pred_check
          %p171 = pneg %p85
        $region18: #{tpu_custom_call.1} parent=11 // pred_check_branch
          %173 = sbr.rel (%p171) target = $region20
        $region19: #{tpu_custom_call.1} parent=11 // pred_region
          _
        $region20: #{tpu_custom_call.1} parent=11 // pred_fallthru
          _
        // Predicated region
        $region21: #{tpu_custom_call.1} parent=11 // pred_check
          %p174 = pneg %p106
        $region22: #{tpu_custom_call.1} parent=11 // pred_check_branch
          %176 = sbr.rel (%p174) target = $region24
        $region23: #{tpu_custom_call.1} parent=11 // pred_region
          _
        $region24: #{tpu_custom_call.1} parent=11 // pred_fallthru
          _
        // Predicated region
        $region25: #{tpu_custom_call.1} parent=11 // pred_check
          %p177 = pneg %p127
        $region26: #{tpu_custom_call.1} parent=11 // pred_check_branch
          %179 = sbr.rel (%p177) target = $region28
        $region27: #{tpu_custom_call.1} parent=11 // pred_region
          _
        $region28: #{tpu_custom_call.1} parent=11 // pred_fallthru
          _
      $region12: #{tpu_custom_call.1} parent=5 // pred_fallthru
        _
      %p180 = scmp.lt.s32.totalorder %s17, 2
      // Predicated region
      $region29: #{tpu_custom_call.1} parent=5 // pred_check
        %p181 = pneg %p180
      $region30: #{tpu_custom_call.1} parent=5 // pred_check_branch
        %183 = sbr.rel (%p181) target = $region32
      $region31: #{tpu_custom_call.1} parent=5 // pred_region
        // Predicated region
        $region33: #{tpu_custom_call.1} parent=31 // pred_check
          %p184 = pneg %p37
        $region34: #{tpu_custom_call.1} parent=31 // pred_check_branch
          %186 = sbr.rel (%p184) target = $region36
        $region35: #{tpu_custom_call.1} parent=31 // pred_region
          %s187 = sand.u32 %s27, 1
          %s188 = scalar_lea.sflag [#allocation6], %s187
          %s189 = sand.u32 %s27, 1
          %s190 = smul.addr %s189, 16
          %s191 = scalar_lea.vmem [#allocation5], %s190
          %s193 = ssub.s32 256, 256
          %194 = vsyncadd %s188, %s193
          %s195 = smul.addr %s17, 4
          %s196 = smul.addr %s195, 64
          %s197 = scalar_lea.hbm %s0, %s196
          %s198 = sshll.u32 %s191, 4
          %s199 = int_to_ptr.vmem [resolvable:$true] %s198
          %204 = dma.hbm_to_vmem [thread:$0]  %s197, 256, %s199, %s188, 128, 128, 8
        $region36: #{tpu_custom_call.1} parent=31 // pred_fallthru
          _
      $region32: #{tpu_custom_call.1} parent=5 // pred_fallthru
        _
      %p205 = scmp.le.s32.totalorder 1, %s17
      %p206 = scmp.lt.s32.totalorder %s17, 3
      %p207 = pnand %p205, %p206
      %p208 = pneg %p207
      // Predicated region
      $region37: #{tpu_custom_call.1} parent=5 // pred_check
        _
      $region38: #{tpu_custom_call.1} parent=5 // pred_check_branch
        %210 = sbr.rel (%p207) target = $region40
      $region39: #{tpu_custom_call.1} parent=5 // pred_region
        %s211 = ssub.s32 %s17, 1
        %s212 = sand.u32 %s30, 1
        %s213 = scalar_lea.sflag [#allocation6], %s212
        %s214 = sand.u32 %s30, 1
        %s215 = smul.addr %s214, 16
        %s216 = scalar_lea.vmem [#allocation5], %s215
        // Predicated region
        $region41: #{tpu_custom_call.1} parent=39 // pred_check
          %p217 = pneg %p43
        $region42: #{tpu_custom_call.1} parent=39 // pred_check_branch
          %219 = sbr.rel (%p217) target = $region44
        $region43: #{tpu_custom_call.1} parent=39 // pred_region
          %220 = dma.done %s213, 256
        $region44: #{tpu_custom_call.1} parent=39 // pred_fallthru
          _
        %s221 = sand.u32 %s30, 1
        %s222 = scalar_lea.sflag [#allocation6], %s221
        %s223 = sand.u32 %s30, 1
        %s224 = smul.addr %s223, 16
        %s225 = scalar_lea.vmem [#allocation5], %s224
        %p226 = pneg %p43
        %p227 = pneg %p40
        %p228 = pneg %p64
        %p229 = pneg %p61
        %p230 = pneg %p85
        %p231 = pneg %p82
        %p232 = pneg %p106
        %p233 = pneg %p103
        %p234 = pneg %p127
        %p235 = pneg %p124
        %p236 = pneg %p153
        %p237 = pneg %p150
        %s238 = sand.u32 %s140, 1
        %s239 = scalar_lea.sflag [#allocation7], %s238
        %s240 = sand.u32 %s140, 1
        %s241 = smul.addr %s240, 8
        %s242 = scalar_lea.vmem [#allocation8], %s241
        %v244 = vld [vmem:[%s216] sm:$0xf]
        %v245 = vld [vmem:[%s216 + $0x8] sm:$0xf]
        %v248 = vunpack.c.l.b16 %v244
        %v249 = vunpack.c.l.b16 %v245
        %v250 = vpack.c.b16 %v249, %v248
        %252 = vst [vmem:[#allocation2] sm:$0xff] %v250
        %v253 = vld [vmem:[%s216] sm:$0xff]
        %v254 = vld [vmem:[%s216 + $0x8] sm:$0xff]
        %v257 = vunpack.c.l.b16 %v253
        %v258 = vunpack.c.h.b16 %v253
        %v259 = vunpack.c.l.b16 %v254
        %v260 = vunpack.c.h.b16 %v254
        %v261 = vpack.c.b16 %v259, %v257
        %v262 = vpack.c.b16 %v260, %v258
        %263 = vrot.lane.b32.xlu0 %v261, 127
        %v264 = vpop.permute.xlu0 %263
        %265 = vrot.lane.b32.xlu0 %v262, 127
        %v266 = vpop.permute.xlu0 %265
        %vm267 = vcmask 1039360
        %v268 = vsel %vm267, %v264, %v266
        %270 = vst [vmem:[#allocation2 + $0x8] sm:$0xff] %v268
        %v271 = vld [vmem:[%s216] sm:$0xff]
        %v272 = vld [vmem:[%s216 + $0x8] sm:$0xff]
        %v275 = vunpack.c.l.b16 %v271
        %v276 = vunpack.c.h.b16 %v271
        %v277 = vunpack.c.l.b16 %v272
        %v278 = vunpack.c.h.b16 %v272
        %v279 = vpack.c.b16 %v277, %v275
        %v280 = vpack.c.b16 %v278, %v276
        %281 = vrot.lane.b32.xlu0 %v279, 126
        %v282 = vpop.permute.xlu0 %281
        %283 = vrot.lane.b32.xlu0 %v280, 126
        %v284 = vpop.permute.xlu0 %283
        %vm285 = vcmask 1031168
        %v286 = vsel %vm285, %v282, %v284
        %288 = vst [vmem:[#allocation2 + $0x10] sm:$0xff] %v286
        %v289 = vld [vmem:[%s216] sm:$0xff]
        %v290 = vld [vmem:[%s216 + $0x8] sm:$0xff]
        %v293 = vunpack.c.l.b16 %v289
        %v294 = vunpack.c.h.b16 %v289
        %v295 = vunpack.c.l.b16 %v290
        %v296 = vunpack.c.h.b16 %v290
        %v297 = vpack.c.b16 %v295, %v293
        %v298 = vpack.c.b16 %v296, %v294
        %299 = vrot.lane.b32.xlu0 %v297, 112
        %v300 = vpop.permute.xlu0 %299
        %301 = vrot.lane.b32.xlu0 %v298, 112
        %v302 = vpop.permute.xlu0 %301
        %vm303 = vcmask 916480
        %v304 = vsel %vm303, %v300, %v302
        %306 = vst [vmem:[#allocation2 + $0x18] sm:$0xff] %v304
        %v307 = vld [vmem:[%s216] sm:$0xff]
        %v308 = vld [vmem:[%s216 + $0x8] sm:$0xff]
        %v311 = vunpack.c.l.b16 %v307
        %v312 = vunpack.c.h.b16 %v307
        %v313 = vunpack.c.l.b16 %v308
        %v314 = vunpack.c.h.b16 %v308
        %v315 = vpack.c.b16 %v313, %v311
        %v316 = vpack.c.b16 %v314, %v312
        %317 = vrot.lane.b32.xlu0 %v315, 111
        %v318 = vpop.permute.xlu0 %317
        %319 = vrot.lane.b32.xlu0 %v316, 111
        %v320 = vpop.permute.xlu0 %319
        %vm321 = vcmask 908288
        %v322 = vsel %vm321, %v318, %v320
        %324 = vst [vmem:[#allocation2 + $0x20] sm:$0xff] %v322
        %v325 = vld [vmem:[%s216] sm:$0xff]
        %v326 = vld [vmem:[%s216 + $0x8] sm:$0xff]
        %v329 = vunpack.c.l.b16 %v325
        %v330 = vunpack.c.h.b16 %v325
        %v331 = vunpack.c.l.b16 %v326
        %v332 = vunpack.c.h.b16 %v326
        %v333 = vpack.c.b16 %v331, %v329
        %v334 = vpack.c.b16 %v332, %v330
        %335 = vrot.lane.b32.xlu0 %v333, 110
        %v336 = vpop.permute.xlu0 %335
        %337 = vrot.lane.b32.xlu0 %v334, 110
        %v338 = vpop.permute.xlu0 %337
        %vm339 = vcmask 900096
        %v340 = vsel %vm339, %v336, %v338
        %342 = vst [vmem:[#allocation2 + $0x28] sm:$0xff] %v340
        %v343 = vld [vmem:[%s216] sm:$0xff]
        %v344 = vld [vmem:[%s216 + $0x8] sm:$0xff]
        %v347 = vunpack.c.l.b16 %v343
        %v348 = vunpack.c.h.b16 %v343
        %v349 = vunpack.c.l.b16 %v344
        %v350 = vunpack.c.h.b16 %v344
        %v351 = vpack.c.b16 %v349, %v347
        %v352 = vpack.c.b16 %v350, %v348
        %353 = vrot.lane.b32.xlu0 %v351, 96
        %v354 = vpop.permute.xlu0 %353
        %355 = vrot.lane.b32.xlu0 %v352, 96
        %v356 = vpop.permute.xlu0 %355
        %vm357 = vcmask 785408
        %v358 = vsel %vm357, %v354, %v356
        %360 = vst [vmem:[#allocation2 + $0x30] sm:$0xff] %v358
        %v361 = vld [vmem:[%s216] sm:$0xff]
        %v362 = vld [vmem:[%s216 + $0x8] sm:$0xff]
        %v365 = vunpack.c.l.b16 %v361
        %v366 = vunpack.c.h.b16 %v361
        %v367 = vunpack.c.l.b16 %v362
        %v368 = vunpack.c.h.b16 %v362
        %v369 = vpack.c.b16 %v367, %v365
        %v370 = vpack.c.b16 %v368, %v366
        %371 = vrot.lane.b32.xlu0 %v369, 95
        %v372 = vpop.permute.xlu0 %371
        %373 = vrot.lane.b32.xlu0 %v370, 95
        %v374 = vpop.permute.xlu0 %373
        %vm375 = vcmask 777216
        %v376 = vsel %vm375, %v372, %v374
        %378 = vst [vmem:[#allocation2 + $0x38] sm:$0xff] %v376
        %v379 = vld [vmem:[%s216] sm:$0xff]
        %v380 = vld [vmem:[%s216 + $0x8] sm:$0xff]
        %v383 = vunpack.c.l.b16 %v379
        %v384 = vunpack.c.h.b16 %v379
        %v385 = vunpack.c.l.b16 %v380
        %v386 = vunpack.c.h.b16 %v380
        %v387 = vpack.c.b16 %v385, %v383
        %v388 = vpack.c.b16 %v386, %v384
        %389 = vrot.lane.b32.xlu0 %v387, 94
        %v390 = vpop.permute.xlu0 %389
        %391 = vrot.lane.b32.xlu0 %v388, 94
        %v392 = vpop.permute.xlu0 %391
        %vm393 = vcmask 769024
        %v394 = vsel %vm393, %v390, %v392
        %396 = vst [vmem:[#allocation2 + $0x40] sm:$0xff] %v394
        %v397 = vld [vmem:[%s1] sm:$0xff]
        %v398 = vld [vmem:[#allocation2] sm:$0xff]
        %v399 = vld [vmem:[#allocation2 + $0x8] sm:$0xff]
        %v400 = vld [vmem:[#allocation2 + $0x10] sm:$0xff]
        %v401 = vld [vmem:[#allocation2 + $0x18] sm:$0xff]
        %v402 = vld [vmem:[#allocation2 + $0x20] sm:$0xff]
        %v403 = vld [vmem:[#allocation2 + $0x28] sm:$0xff]
        %v404 = vld [vmem:[#allocation2 + $0x30] sm:$0xff]
        %v405 = vld [vmem:[#allocation2 + $0x38] sm:$0xff]
        %v406 = vld [vmem:[#allocation2 + $0x40] sm:$0xff]
        %v407 = vld [vmem:[%s2] sm:$0xff]
        %409 = vset.pattern.permute.xlu0 0
        %410 = vperm.xlu0 %409, %v407
        %v411 = vpop.permute.xlu0 %410
        %v414 = vunpack.c.l.b16 %v397
        %v415 = vunpack.c.h.b16 %v397
        %v416 = vpack.c.b16 %v414, %v414
        %v417 = vpack.c.b16 %v415, %v415
        %vm419 = vcmask 130048
        %v421 = vsel %vm419, %v417, 0
        %423 = vmatprep.subr.bf16.mxu0 0
        %424 = vmatpush1.bf16.msra.mxu0 %v398
        %425 = vmatprep.subr.bf16.mxu0 0
        %426 = vmatpush1.bf16.msra.mxu0 %v399
        %427 = vmatprep.subr.bf16.mxu0 0
        %428 = vmatpush1.bf16.msra.mxu0 %v400
        %429 = vmatprep.subr.bf16.mxu0 0
        %430 = vmatpush1.bf16.msra.mxu0 %v401
        %431 = vmatprep.subr.bf16.mxu0 0
        %432 = vmatpush1.bf16.msra.mxu0 %v402
        %433 = vmatprep.subr.bf16.mxu0 0
        %434 = vmatpush1.bf16.msra.mxu0 %v403
        %435 = vmatprep.subr.bf16.mxu0 0
        %436 = vmatpush1.bf16.msra.mxu0 %v404
        %437 = vmatprep.subr.bf16.mxu0 0
        %438 = vmatpush1.bf16.msra.mxu0 %v405
        %439 = vmatprep.subr.bf16.mxu0 0
        %440 = vmatpush1.bf16.msra.mxu0 %v406
        %441 = vmatprep.subr.bf16.mxu0 0
        %442 = vmatpush1.bf16.msra.mxu0 0
        %443 = vmatprep.subr.bf16.mxu0 0
        %444 = vmatpush1.bf16.msra.mxu0 0
        %445 = vmatprep.subr.bf16.mxu0 0
        %446 = vmatpush1.bf16.msra.mxu0 0
        %447 = vmatprep.subr.bf16.mxu0 0
        %448 = vmatpush1.bf16.msra.mxu0 0
        %449 = vmatprep.subr.bf16.mxu0 0
        %450 = vmatpush1.bf16.msra.mxu0 0
        %451 = vmatprep.subr.bf16.mxu0 0
        %452 = vmatpush1.bf16.msra.mxu0 0
        %453 = vmatprep.subr.bf16.mxu0 0
        %454 = vmatpush1.bf16.msra.mxu0 0
        %455 = vmatprep.mubr.bf16.mxu0 %v421
        %456 = vmatmul.mubr.bf16.gmra.mrb[0].mxu0 %v416
        %v457 = vpop.f32.mrb[0].mxu0
        %v458 = vadd.f32 %v411, %v457
        %v459 = vpop.f32.mrb[0].mxu0
        %v460 = vpop.f32.mrb[0].mxu0
        %v461 = vpop.f32.mrb[0].mxu0
        %462 = vdwg.mxu0
        %vm463 = vcmp.ge.f32.partialorder %v458, 0.0
        %v464 = vmul.f32 %v458, 0.2
        %v465 = vsel %vm463, %v458, %v464
        %v466 = vmul.f32 %v465, 1.4142135
        %v467 = vlaneseq
        %v468 = vand.u32 %v467, 127
        %vm469 = vcmp.lt.s32.totalorder %v468, 0
        %v470 = vsub.s32 0, %v468
        %v471 = vsel %vm469, %v470, %v468
        %v472 = vshrl.u32 %v471, 4
        %v473 = vand.u32 %v471, 15
        %v474 = vsub.s32 0, %v473
        %v475 = vsel %vm469, %v474, %v473
        %vm476 = vcmp.ne.s32.totalorder %v475, 0
        %vm477 = vcmp.lt.s32.totalorder %v475, 0
        %vm478 = vmand %vm477, %vm476
        %v479 = vadd.s32 %v475, 16
        %v480 = vsel %vm478, %v479, %v475
        %vm481 = vcmp.lt.s32.totalorder %v480, 8
        %v482 = vsel %vm481, 1, 0
        %vm483 = vcmp.eq.s32.totalorder %v482, 1
        %v484 = vsel %vm483, %v466, 0.0
        %485 = vst [vmem:[#allocation3] sm:$0xff] 0.0
        %vm486 = vcmask 392192
        %487 = vst.msk [vmem:[#allocation3 + $0x8] sm:$0xff] %vm486, 0.0
        %489 = vrot.lane.b32.xlu0 %v484, 17
        %v490 = vpop.permute.xlu0 %489
        %vm492 = vcmask 1047688
        %493 = vst.msk [vmem:[#allocation3] sm:$0xff] %vm492, %v490
        %vm494 = vcmask 138240
        %495 = vst.msk [vmem:[#allocation3 + $0x8] sm:$0xff] %vm494, %v490
        %v496 = vld [vmem:[#allocation3] sm:$0xff]
        %v497 = vpack.c.bf16 %v496, %v496
        %498 = vst [vmem:[#allocation4] sm:$0xf] %v497
        %v499 = vld [vmem:[#allocation3] sm:$0xff]
        %v500 = vld [vmem:[#allocation3 + $0x8] sm:$0xff]
        %v501 = vpack.c.bf16 %v499, %v499
        %v502 = vpack.c.bf16 %v500, %v500
        %v505 = vunpack.c.l.b16 %v501
        %v506 = vunpack.c.l.b16 %v502
        %v507 = vpack.c.b16 %v506, %v505
        %508 = vrot.lane.b32.xlu0 %v507, 127
        %v509 = vpop.permute.xlu0 %508
        %v510 = vrot.slane %v509, 4
        %v511 = vsel %vm267, %v509, %v510
        %513 = vst [vmem:[#allocation4 + $0x4] sm:$0xf] %v511
        %v514 = vld [vmem:[#allocation3] sm:$0xff]
        %v515 = vld [vmem:[#allocation3 + $0x8] sm:$0xff]
        %v516 = vpack.c.bf16 %v514, %v514
        %v517 = vpack.c.bf16 %v515, %v515
        %v520 = vunpack.c.l.b16 %v516
        %v521 = vunpack.c.l.b16 %v517
        %v522 = vpack.c.b16 %v521, %v520
        %523 = vrot.lane.b32.xlu0 %v522, 126
        %v524 = vpop.permute.xlu0 %523
        %v525 = vrot.slane %v524, 4
        %v526 = vsel %vm285, %v524, %v525
        %528 = vst [vmem:[#allocation4 + $0x8] sm:$0xf] %v526
        %v529 = vld [vmem:[#allocation3] sm:$0xff]
        %v530 = vld [vmem:[#allocation3 + $0x8] sm:$0xff]
        %v531 = vpack.c.bf16 %v529, %v529
        %v532 = vpack.c.bf16 %v530, %v530
        %v535 = vunpack.c.l.b16 %v531
        %v536 = vunpack.c.l.b16 %v532
        %v537 = vpack.c.b16 %v536, %v535
        %538 = vrot.lane.b32.xlu0 %v537, 112
        %v539 = vpop.permute.xlu0 %538
        %v540 = vrot.slane %v539, 4
        %v541 = vsel %vm303, %v539, %v540
        %543 = vst [vmem:[#allocation4 + $0xc] sm:$0xf] %v541
        %v544 = vld [vmem:[#allocation3] sm:$0xff]
        %v545 = vld [vmem:[#allocation3 + $0x8] sm:$0xff]
        %v546 = vpack.c.bf16 %v544, %v544
        %v547 = vpack.c.bf16 %v545, %v545
        %v550 = vunpack.c.l.b16 %v546
        %v551 = vunpack.c.l.b16 %v547
        %v552 = vpack.c.b16 %v551, %v550
        %553 = vrot.lane.b32.xlu0 %v552, 111
        %v554 = vpop.permute.xlu0 %553
        %v555 = vrot.slane %v554, 4
        %v556 = vsel %vm321, %v554, %v555
        %558 = vst [vmem:[#allocation4 + $0x10] sm:$0xf] %v556
        %v559 = vld [vmem:[#allocation3] sm:$0xff]
        %v560 = vld [vmem:[#allocation3 + $0x8] sm:$0xff]
        %v561 = vpack.c.bf16 %v559, %v559
        %v562 = vpack.c.bf16 %v560, %v560
        %v565 = vunpack.c.l.b16 %v561
        %v566 = vunpack.c.l.b16 %v562
        %v567 = vpack.c.b16 %v566, %v565
        %568 = vrot.lane.b32.xlu0 %v567, 110
        %v569 = vpop.permute.xlu0 %568
        %v570 = vrot.slane %v569, 4
        %v571 = vsel %vm339, %v569, %v570
        %573 = vst [vmem:[#allocation4 + $0x14] sm:$0xf] %v571
        %v574 = vld [vmem:[#allocation3] sm:$0xff]
        %v575 = vld [vmem:[#allocation3 + $0x8] sm:$0xff]
        %v576 = vpack.c.bf16 %v574, %v574
        %v577 = vpack.c.bf16 %v575, %v575
        %v580 = vunpack.c.l.b16 %v576
        %v581 = vunpack.c.l.b16 %v577
        %v582 = vpack.c.b16 %v581, %v580
        %583 = vrot.lane.b32.xlu0 %v582, 96
        %v584 = vpop.permute.xlu0 %583
        %v585 = vrot.slane %v584, 4
        %v586 = vsel %vm357, %v584, %v585
        %588 = vst [vmem:[#allocation4 + $0x18] sm:$0xf] %v586
        %v589 = vld [vmem:[#allocation3] sm:$0xff]
        %v590 = vld [vmem:[#allocation3 + $0x8] sm:$0xff]
        %v591 = vpack.c.bf16 %v589, %v589
        %v592 = vpack.c.bf16 %v590, %v590
        %v595 = vunpack.c.l.b16 %v591
        %v596 = vunpack.c.l.b16 %v592
        %v597 = vpack.c.b16 %v596, %v595
        %598 = vrot.lane.b32.xlu0 %v597, 95
        %v599 = vpop.permute.xlu0 %598
        %v600 = vrot.slane %v599, 4
        %v601 = vsel %vm375, %v599, %v600
        %603 = vst [vmem:[#allocation4 + $0x1c] sm:$0xf] %v601
        %v604 = vld [vmem:[#allocation3] sm:$0xff]
        %v605 = vld [vmem:[#allocation3 + $0x8] sm:$0xff]
        %v606 = vpack.c.bf16 %v604, %v604
        %v607 = vpack.c.bf16 %v605, %v605
        %v610 = vunpack.c.l.b16 %v606
        %v611 = vunpack.c.l.b16 %v607
        %v612 = vpack.c.b16 %v611, %v610
        %613 = vrot.lane.b32.xlu0 %v612, 94
        %v614 = vpop.permute.xlu0 %613
        %v615 = vrot.slane %v614, 4
        %v616 = vsel %vm393, %v614, %v615
        %618 = vst [vmem:[#allocation4 + $0x20] sm:$0xf] %v616
        %v619 = vld [vmem:[%s3] sm:$0xf]
        %v620 = vld [vmem:[#allocation4] sm:$0xf]
        %v621 = vld [vmem:[#allocation4 + $0x4] sm:$0xf]
        %v622 = vld [vmem:[#allocation4 + $0x8] sm:$0xf]
        %v623 = vld [vmem:[#allocation4 + $0xc] sm:$0xf]
        %v624 = vld [vmem:[#allocation4 + $0x10] sm:$0xf]
        %v625 = vld [vmem:[#allocation4 + $0x14] sm:$0xf]
        %v626 = vld [vmem:[#allocation4 + $0x18] sm:$0xf]
        %v627 = vld [vmem:[#allocation4 + $0x1c] sm:$0xf]
        %v628 = vld [vmem:[#allocation4 + $0x20] sm:$0xf]
        %v629 = vld [vmem:[%s4] sm:$0xff]
        %631 = vset.pattern.permute.xlu0 0
        %632 = vperm.xlu0 %631, %v629
        %v633 = vpop.permute.xlu0 %632
        %v644 = vunpack.c.l.b16 %v620
        %v645 = vunpack.c.l.b16 %v621
        %v646 = vunpack.c.l.b16 %v622
        %v647 = vunpack.c.l.b16 %v623
        %v648 = vunpack.c.l.b16 %v624
        %v649 = vunpack.c.l.b16 %v625
        %v650 = vunpack.c.l.b16 %v626
        %v651 = vunpack.c.l.b16 %v627
        %v652 = vunpack.c.l.b16 %v628
        %v653 = vpack.c.b16 %v645, %v644
        %v654 = vpack.c.b16 %v647, %v646
        %v655 = vpack.c.b16 %v649, %v648
        %v656 = vpack.c.b16 %v651, %v650
        %v657 = vpack.c.b16 %v652, %v652
        %vm662 = vcmask 588800
        %v664 = vsel %vm662, %v619, 0
        %vm666 = vcmask 1043456
        %v668 = vsel %vm666, %v657, 0
        %670 = vmatprep.subr.bf16.mxu0 0
        %671 = vmatpush1.bf16.msra.mxu0 %v653
        %672 = vmatprep.subr.bf16.mxu0 0
        %673 = vmatpush1.bf16.msra.mxu0 %v654
        %674 = vmatprep.subr.bf16.mxu0 0
        %675 = vmatpush1.bf16.msra.mxu0 %v655
        %676 = vmatprep.subr.bf16.mxu0 0
        %677 = vmatpush1.bf16.msra.mxu0 %v656
        %678 = vmatprep.subr.bf16.mxu0 0
        %679 = vmatpush1.bf16.msra.mxu0 %v668
        %680 = vmatprep.subr.bf16.mxu0 0
        %681 = vmatpush1.bf16.msra.mxu0 0
        %682 = vmatprep.subr.bf16.mxu0 0
        %683 = vmatpush1.bf16.msra.mxu0 0
        %684 = vmatprep.subr.bf16.mxu0 0
        %685 = vmatpush1.bf16.msra.mxu0 0
        %686 = vmatprep.subr.bf16.mxu0 0
        %687 = vmatpush1.bf16.msra.mxu0 0
        %688 = vmatprep.subr.bf16.mxu0 0
        %689 = vmatpush1.bf16.msra.mxu0 0
        %690 = vmatprep.subr.bf16.mxu0 0
        %691 = vmatpush1.bf16.msra.mxu0 0
        %692 = vmatprep.subr.bf16.mxu0 0
        %693 = vmatpush1.bf16.msra.mxu0 0
        %694 = vmatprep.subr.bf16.mxu0 0
        %695 = vmatpush1.bf16.msra.mxu0 0
        %696 = vmatprep.subr.bf16.mxu0 0
        %697 = vmatpush1.bf16.msra.mxu0 0
        %698 = vmatprep.subr.bf16.mxu0 0
        %699 = vmatpush1.bf16.msra.mxu0 0
        %700 = vmatprep.subr.bf16.mxu0 0
        %701 = vmatpush1.bf16.msra.mxu0 0
        %702 = vmatprep.mubr.bf16.mxu0 0
        %703 = vmatmul.mubr.bf16.gmra.mrb[0].mxu0 %v664
        %v704 = vpop.f32.mrb[0].mxu0
        %v705 = vadd.f32 %v633, %v704
        %v706 = vpop.f32.mrb[0].mxu0
        %v707 = vpop.f32.mrb[0].mxu0
        %v708 = vpop.f32.mrb[0].mxu0
        %709 = vdwg.mxu0
        %vm710 = vcmp.ge.f32.partialorder %v705, 0.0
        %v711 = vmul.f32 %v705, 0.2
        %v712 = vsel %vm710, %v705, %v711
        %v713 = vmul.f32 %v712, 1.4142135
        %714 = vst [vmem:[%s242] sm:$0xff] %v713
        %s715 = sand.u32 %s140, 1
        %s716 = scalar_lea.sflag [#allocation7], %s715
        %s717 = sand.u32 %s140, 1
        %s718 = smul.addr %s717, 8
        %s719 = scalar_lea.vmem [#allocation8], %s718
        // Predicated region
        $region45: #{tpu_custom_call.1} parent=39 // pred_check
          %p720 = pneg %p150
        $region46: #{tpu_custom_call.1} parent=39 // pred_check_branch
          %722 = sbr.rel (%p720) target = $region48
        $region47: #{tpu_custom_call.1} parent=39 // pred_region
          %s724 = ssub.s32 128, 128
          %725 = vsyncadd %s716, %s724
          %s726 = smul.addr %s22, 128
          %s727 = scalar_lea.hbm %s5, %s726
          %s729 = sshll.u32 %s719, 4
          %s730 = int_to_ptr.vmem [resolvable:$true] %s729
          %732 = dma.vmem_to_hbm [thread:$0]  %s730, 128, %s727, %s716
        $region48: #{tpu_custom_call.1} parent=39 // pred_fallthru
          _
      $region40: #{tpu_custom_call.1} parent=5 // pred_fallthru
        _
      %p733 = scmp.le.s32.totalorder 2, %s17
      // Predicated region
      $region49: #{tpu_custom_call.1} parent=5 // pred_check
        %p734 = pneg %p733
      $region50: #{tpu_custom_call.1} parent=5 // pred_check_branch
        %736 = sbr.rel (%p734) target = $region52
      $region51: #{tpu_custom_call.1} parent=5 // pred_region
        %s737 = ssub.s32 %s17, 2
        // Predicated region
        $region53: #{tpu_custom_call.1} parent=51 // pred_check
          %p738 = pneg %p156
        $region54: #{tpu_custom_call.1} parent=51 // pred_check_branch
          %740 = sbr.rel (%p738) target = $region56
        $region55: #{tpu_custom_call.1} parent=51 // pred_region
          %s741 = sand.u32 %s141, 1
          %s742 = scalar_lea.sflag [#allocation7], %s741
          %s743 = sand.u32 %s141, 1
          %s744 = smul.addr %s743, 8
          %s745 = scalar_lea.vmem [#allocation8], %s744
          %746 = dma.done %s742, 128
        $region56: #{tpu_custom_call.1} parent=51 // pred_fallthru
          _
      $region52: #{tpu_custom_call.1} parent=5 // pred_fallthru
        _
    $region6: #{tpu_custom_call.1} parent=1 // loop_footer
      %s21 = sadd.s32 1, %s17
    $region7: #{tpu_custom_call.1} parent=1 // loop_footer_branch
      %16 = sbr.rel target = $region3
    $region8: #{tpu_custom_call.1} parent=1 // loop_exit
      _
    %747 = vsyncpa [#allocation6], 1
    %s748 = scalar_lea.sflag [#allocation6], 1
    %749 = vsyncpa %s748, 1
    %750 = vsyncpa [#allocation7], 1
    %s751 = scalar_lea.sflag [#allocation7], 1
    %752 = vsyncpa %s751, 1

</llo_original>
